<compile_context>
chip_gen: v7x
topology: tpu7x:2x2x1
jax: 0.10.0
libtpu: 0.0.40
codegen_flags: <defaults>
</compile_context>

<pallas_src>
import functools

import jax
import jax.numpy as jnp
from jax.experimental import pallas as pl
from jax.experimental.pallas import tpu as pltpu

LANE = 128
SUBLANE = 8
_MIN_BLOCK_BYTES = 2 * 1024 * 1024      # keep blocks >= ~2 MiB even when splitting
_DEFAULT_VMEM_CAP = 64 * 1024 * 1024    # conservative fallback (v7x-sized)


def _delu_kernel(np5_ref, x_ref, o_ref):
    # np5_ref: (1,) f32 scalar holding (n + 0.5), in SMEM.
    # x_ref / o_ref: (tile_rows, 128) tiles in the caller's dtype.
    x = x_ref[...]
    # bf16 stays native on the VPU/EUP (v6e/v7x; legalized to f32 on v5e); every
    # other dtype is computed in f32.
    cdt = jnp.bfloat16 if x.dtype == jnp.bfloat16 else jnp.float32
    x = x.astype(cdt)
    np5 = np5_ref[0].astype(cdt)
    e = jnp.exp(-x)                                    # single EUP exp, reused
    # Sigmoid denominator via approximate EUP reciprocal.  The f32 casts are
    # no-ops for f32 inputs and touch only one intermediate value for bf16.
    sig = pl.reciprocal(e.astype(jnp.float32) + 1.0, approx=True).astype(cdt)
    silu = x * sig
    delu = np5 * x + (1.0 - e)                         # |exp(-x)-1| == 1-exp(-x), x > 0
    o_ref[...] = jnp.where(x <= 0.0, silu, delu).astype(o_ref.dtype)


def _round_up(a: int, b: int) -> int:
    return ((a + b - 1) // b) * b


def _round_down(a: int, b: int) -> int:
    return (a // b) * b


@functools.lru_cache(maxsize=None)
def _vmem_capacity_bytes() -> int:
    try:
        info = pltpu.get_tpu_info()
        return int(getattr(info, "vmem_capacity_bytes", _DEFAULT_VMEM_CAP))
    except Exception:
        return _DEFAULT_VMEM_CAP


def _vmem_limit_bytes() -> int:
    # ~3/4 of physical VMEM, capped at 96 MiB (v5e/v6e -> 96 MiB, v7x -> 48 MiB).
    cap = _vmem_capacity_bytes()
    return int(min(max(cap * 3 // 4, 32 * 1024 * 1024), 96 * 1024 * 1024))


def _target_block_bytes() -> int:
    # ~8 MiB blocks on 128-MiB-VMEM parts (v5e/v6e), ~6 MiB on 64-MiB parts (v7x),
    # so in + out double-buffered (4 buffers) stays well under the scoped limit
    # even with Mosaic's internal elementwise temporaries.
    return (8 * 1024 * 1024
            if _vmem_capacity_bytes() >= 100 * 1024 * 1024
            else 6 * 1024 * 1024)


def _choose_tile_rows(rows: int, itemsize: int) -> int:
    """Row tile sized by bytes; >= ~8 grid steps for large arrays; full block otherwise."""
    align = max(SUBLANE, 32 // max(itemsize, 1))       # 8 rows for f32, 16 for bf16
    row_bytes = LANE * itemsize
    tr_max = max(align, _round_down(_target_block_bytes() // row_bytes, align))
    tr_min = max(align, _round_down(_MIN_BLOCK_BYTES // row_bytes, align))
    tr_split = max(align, _round_up(pl.cdiv(rows, 8), align))   # aim for ~8 steps
    tr = min(tr_max, max(tr_min, tr_split))
    if rows <= tr:
        return rows                                    # single full-array block
    return tr


def delu(x: jax.Array, n: jax.Array) -> jax.Array:
    """Elementwise DELU.  x: any shape (e.g. NCHW).  n: scalar parameter."""
    orig_shape = x.shape
    total = x.size
    if total == 0:
        return x

    pad = (-total) % LANE
    if pad:
        # Ragged total: pad the (tiny) tail up to the next lane multiple.  This
        # costs an extra HBM pass on input/output; typical NN tensors (lane-
        # aligned totals) take the copy-free branch below.
        flat = jnp.pad(x.reshape(-1), (0, pad))
    else:
        flat = x.reshape(-1)                           # free reshape of contiguous data
    rows = (total + pad) // LANE
    x2d = flat.reshape(rows, LANE)

    tr = _choose_tile_rows(rows, x2d.dtype.itemsize)
    grid = (pl.cdiv(rows, tr),)

    # Hoist the scalar math: pass (n + 0.5) precomputed as a single SMEM scalar.
    np5 = jnp.asarray(n, jnp.float32).reshape(-1)[:1] + 0.5

    out2d = pl.pallas_call(
        _delu_kernel,
        out_shape=jax.ShapeDtypeStruct((rows, LANE), x.dtype),
        grid_spec=pltpu.PrefetchScalarGridSpec(
            num_scalar_prefetch=0,
            grid=grid,
            in_specs=[
                pl.BlockSpec(memory_space=pltpu.MemorySpace.SMEM),   # (n + 0.5)
                pl.BlockSpec((tr, LANE), lambda i: (i, 0)),          # x tile
            ],
            out_specs=pl.BlockSpec((tr, LANE), lambda i: (i, 0)),
        ),
        compiler_params=pltpu.CompilerParams(
            dimension_semantics=("parallel",),
            vmem_limit_bytes=_vmem_limit_bytes(),
        ),
    )(np5, x2d)

    out = out2d.reshape(-1)
    if pad:
        out = out[:total]
    return out.reshape(orig_shape)


def delu_reference(x, n):
    xf = x.astype(jnp.float32)
    nf = jnp.asarray(n, jnp.float32).reshape(-1)[0]
    silu = xf * jax.nn.sigmoid(xf)
    left = jnp.where(xf <= 0.0, silu, 0.0)
    d = (nf + 0.5) * xf + jnp.abs(jnp.exp(-xf) - 1.0)
    right = jnp.where(xf > 0.0, d, 0.0)
    return left + right


if __name__ == "__main__":
    key = jax.random.PRNGKey(0)
    # Parameter n initialized deterministically to 0.0 (matches nn.init.constant_).
    n = jnp.zeros((1,), dtype=jnp.float32)

    # f32, NCHW, lane-aligned total -> copy-free path.
    x32 = jax.random.normal(key, (2, 4, 16, 16), dtype=jnp.float32)
    out32 = jax.block_until_ready(delu(x32, n))
    ref32 = delu_reference(x32, n)
    assert out32.shape == x32.shape and out32.dtype == x32.dtype
    # Tolerance accounts for the approximate EUP reciprocal used for sigmoid.
    assert jnp.allclose(out32, ref32, atol=2e-3, rtol=2e-3), "f32 mismatch vs reference"

    # bf16: native bf16 VPU/EUP math inside the kernel.
    xbf = jax.random.normal(jax.random.PRNGKey(1), (2, 4, 16, 16),
                            dtype=jnp.float32).astype(jnp.bfloat16)
    outbf = jax.block_until_ready(delu(xbf, n))
    refbf = delu_reference(xbf, n)
    assert outbf.shape == xbf.shape and outbf.dtype == xbf.dtype
    assert jnp.allclose(outbf.astype(jnp.float32), refbf, atol=5e-2, rtol=5e-2), \
        "bf16 mismatch vs reference"

    # Ragged element count (105) exercises the tail-pad fallback path.
    xr = jax.random.normal(jax.random.PRNGKey(2), (3, 5, 7), dtype=jnp.float32)
    outr = jax.block_until_ready(delu(xr, n))
    refr = delu_reference(xr, n)
    assert outr.shape == xr.shape
    assert jnp.allclose(outr, refr, atol=2e-3, rtol=2e-3), "ragged mismatch vs reference"

    print("KERNEL_OK")
</pallas_src>

<mosaic_0001>
module attributes {stable_mosaic.version = 11 : i64} {
  func.func @_delu_kernel(%arg0: i32, %arg1: memref<1xf32, #tpu.memory_space<smem>>, %arg2: memref<16x128xf32, #tpu.memory_space<vmem>>, %arg3: memref<16x128xf32, #tpu.memory_space<vmem>>) attributes {dimension_semantics = [#tpu.dimension_semantics<parallel>], iteration_bounds = array<i64: 1>, scalar_prefetch = 0 : i64, scratch_operands = 0 : i64, tpu.core_type = #tpu.core_type<tc>, window_params = [{transform_indices = @transform_0, window_bounds = array<i64: 1>}, {transform_indices = @transform_1, window_bounds = array<i64: 16, 128>}, {transform_indices = @transform_2, window_bounds = array<i64: 16, 128>}]} {
    %c0 = arith.constant 0 : index
    %c0_0 = arith.constant 0 : index
    %0 = vector.load %arg2[%c0, %c0_0] : memref<16x128xf32, #tpu.memory_space<vmem>>, vector<16x128xf32>
    %c0_1 = arith.constant 0 : index
    %1 = memref.load %arg1[%c0_1] : memref<1xf32, #tpu.memory_space<smem>>
    %cst = arith.constant 0.000000e+00 : f32
    %2 = vector.broadcast %cst : f32 to vector<16x128xf32>
    %3 = arith.subf %2, %0 : vector<16x128xf32>
    %4 = math.exp %3 : vector<16x128xf32>
    %cst_2 = arith.constant 1.000000e+00 : f32
    %5 = vector.broadcast %cst_2 : f32 to vector<16x128xf32>
    %6 = arith.addf %4, %5 : vector<16x128xf32>
    %7 = tpu.reciprocal %6 {approx = true} : vector<16x128xf32> -> vector<16x128xf32>
    %8 = arith.mulf %0, %7 : vector<16x128xf32>
    %9 = vector.broadcast %1 : f32 to vector<16x128xf32>
    %10 = arith.mulf %9, %0 : vector<16x128xf32>
    %cst_3 = arith.constant 1.000000e+00 : f32
    %11 = vector.broadcast %cst_3 : f32 to vector<16x128xf32>
    %12 = arith.subf %11, %4 : vector<16x128xf32>
    %13 = arith.addf %10, %12 : vector<16x128xf32>
    %cst_4 = arith.constant 0.000000e+00 : f32
    %14 = vector.broadcast %cst_4 : f32 to vector<16x128xf32>
    %15 = arith.cmpf ole, %0, %14 : vector<16x128xf32>
    %16 = arith.select %15, %8, %13 : vector<16x128xi1>, vector<16x128xf32>
    %c0_5 = arith.constant 0 : index
    %c0_6 = arith.constant 0 : index
    %17 = vector.load %arg3[%c0_5, %c0_6] : memref<16x128xf32, #tpu.memory_space<vmem>>, vector<16x128xf32>
    tpu.vector_store %arg3[%c0_5, %c0_6], %16 {strides = array<i32>} : memref<16x128xf32, #tpu.memory_space<vmem>>, vector<16x128xf32>,
    return
  }
  func.func @transform_0(%arg0: i32) -> i32 {
    %c0_i32 = arith.constant 0 : i32
    %c0_i32_0 = arith.constant 0 : i32
    return %c0_i32 : i32
  }
  func.func @transform_1(%arg0: i32) -> (i32, i32) {
    %c0_i32 = arith.constant 0 : i32
    %c0_i32_0 = arith.constant 0 : i32
    return %arg0, %c0_i32 : i32, i32
  }
  func.func @transform_2(%arg0: i32) -> (i32, i32) {
    %c0_i32 = arith.constant 0 : i32
    %c0_i32_0 = arith.constant 0 : i32
    return %arg0, %c0_i32 : i32, i32
  }
}

</mosaic_0001>

<llo_original>
// kernel: tpu_custom_call.1
$region0: #{tpu_custom_call.1}
  #allocation0 [shape = 'u32[]', space=smem, size = 0x4, offset = 0x4, fixed_abs, tag = 'smem constant byte address 0x4 - core index']
  #allocation1 [shape = 'u32[144,128]{1,0:T(1,128)}', space=vmem, size = 0x12000, scoped, tag = 'internal scratch']
  #allocation2 [shape = 'f32[1]{0:T(128)S(6)}', space=smem, size = 0x200, scoped, tag = 'scoped memory for tpu_custom_call.1']
  %s0 = inlined_call_operand.<no memory space> [shape: f32[1], index: 0, kind: input, shape index: {}]
  %s1 = inlined_call_operand.hbm [shape: f32[16,128], index: 1, kind: input, shape index: {}]
  %s2 = inlined_call_operand.hbm [shape: f32[16,128], index: 2, kind: output, shape index: {}]
  %s3 = sld [smem:[#allocation0]]
  $region22: #{tpu_custom_call.1} parent=0
    _
  %s5 = ssub.s32 1, %s3
  %s6 = scalar_select 0, %s5, %s3
  %7 = sst [smem:[#allocation2]] %s0
  $region1: #{tpu_custom_call.1} parent=0
    #allocation3 [shape = 'u8[8192]{0}', space=vmem, size = 0x2000, scoped, tag = 'input window, operand 1, single buffered']
    #allocation4 [shape = 's32[1]{0}', space=sflag, size = 0x4, scoped, tag = 'scoped memory for tpu_custom_call.1']
    #allocation5 [shape = 's32[1]{0}', space=sflag, size = 0x4, scoped, tag = 'scoped memory for tpu_custom_call.1']
    #allocation6 [shape = 'u8[8192]{0}', space=vmem, size = 0x2000, scoped, tag = 'output window, operand 0, single buffered']
    %8 = vsyncpa [#allocation4], 0
    %9 = vsyncpa [#allocation5], 0
    // Predicated region
    $region2: #{tpu_custom_call.1} parent=1 // pred_check
      _
    $region3: #{tpu_custom_call.1} parent=1 // pred_check_branch
      %11 = sbr.rel (0) target = $region5
    $region4: #{tpu_custom_call.1} parent=1 // pred_region
      _
    $region5: #{tpu_custom_call.1} parent=1 // pred_fallthru
      _
    // Predicated region
    $region6: #{tpu_custom_call.1} parent=1 // pred_check
      _
    $region7: #{tpu_custom_call.1} parent=1 // pred_check_branch
      %13 = sbr.rel (0) target = $region9
    $region8: #{tpu_custom_call.1} parent=1 // pred_region
      %s15 = ssub.s32 256, 256
      %16 = vsyncadd [#allocation4], %s15
      %s17 = sshll.u32 [#allocation3], 4
      %s18 = int_to_ptr.vmem [resolvable:$true] %s17
      %23 = dma.hbm_to_vmem [thread:$0]  %s1, 256, %s18, [#allocation4], 128, 128, 8
    $region9: #{tpu_custom_call.1} parent=1 // pred_fallthru
      _
    // Predicated region
    $region10: #{tpu_custom_call.1} parent=1 // pred_check
      _
    $region11: #{tpu_custom_call.1} parent=1 // pred_check_branch
      %25 = sbr.rel (0) target = $region13
    $region12: #{tpu_custom_call.1} parent=1 // pred_region
      %26 = dma.done [#allocation4], 256
    $region13: #{tpu_custom_call.1} parent=1 // pred_fallthru
      _
    %v27 = vld [vmem:[#allocation3] sm:$0xff]
    %v28 = vld [vmem:[#allocation3 + $0x8] sm:$0xff]
    %s29 = sld [smem:[#allocation2]]
    %v30 = vsub.f32 0.0, %v27
    %v31 = vsub.f32 0.0, %v28
    %v32 = vmul.f32 %v30, 1.442695
    %v33 = vpow.pop %v32
    %v34 = vmul.f32 %v31, 1.442695
    %v35 = vpow.pop %v34
    %v36 = vadd.f32 %v33, 1.0
    %v37 = vadd.f32 %v35, 1.0
    %v38 = vrcp.pop %v36
    %v39 = vrcp.pop %v37
    %v40 = vmul.f32 %v27, %v38
    %v41 = vmul.f32 %v28, %v39
    %v42 = vstv %s29
    %v43 = vmul.f32 %v42, %v27
    %v44 = vmul.f32 %v42, %v28
    %v45 = vsub.f32 1.0, %v33
    %v46 = vsub.f32 1.0, %v35
    %v47 = vadd.f32 %v43, %v45
    %v48 = vadd.f32 %v44, %v46
    %vm49 = vcmp.le.f32.partialorder %v27, 0.0
    %vm50 = vcmp.le.f32.partialorder %v28, 0.0
    %v51 = vsel %vm49, %v40, %v47
    %v52 = vsel %vm50, %v41, %v48
    %53 = vst [vmem:[#allocation6] sm:$0xff] %v51
    %54 = vst [vmem:[#allocation6 + $0x8] sm:$0xff] %v52
    // Predicated region
    $region14: #{tpu_custom_call.1} parent=1 // pred_check
      _
    $region15: #{tpu_custom_call.1} parent=1 // pred_check_branch
      %56 = sbr.rel (0) target = $region17
    $region16: #{tpu_custom_call.1} parent=1 // pred_region
      %s58 = ssub.s32 256, 256
      %59 = vsyncadd [#allocation5], %s58
      %s60 = sshll.u32 [#allocation6], 4
      %s61 = int_to_ptr.vmem [resolvable:$true] %s60
      %66 = dma.vmem_to_hbm [thread:$0]  %s61, 256, %s2, [#allocation5], 128, 128, 8
    $region17: #{tpu_custom_call.1} parent=1 // pred_fallthru
      _
    // Predicated region
    $region18: #{tpu_custom_call.1} parent=1 // pred_check
      _
    $region19: #{tpu_custom_call.1} parent=1 // pred_check_branch
      %68 = sbr.rel (0) target = $region21
    $region20: #{tpu_custom_call.1} parent=1 // pred_region
      %69 = dma.done [#allocation5], 256
    $region21: #{tpu_custom_call.1} parent=1 // pred_fallthru
      _
    %70 = vsyncpa [#allocation4], 1
    %71 = vsyncpa [#allocation5], 1

</llo_original>
